<compile_context>
chip_gen: v5e
topology: v5e:2x2
jax: 0.10.0
libtpu: 0.0.40
codegen_flags: <defaults>
</compile_context>

<pallas_src>
import functools

import jax
import jax.numpy as jnp
from jax import lax
from jax.experimental import pallas as pl
from jax.experimental.pallas import tpu as pltpu


def _l2_normalize_kernel(z_ref, out_ref):
    # F.normalize(x, dim=-1): x / max(||x||, 1e-12)  ==  x * min(rsqrt(||x||^2), 1e12)
    x = z_ref[...].astype(jnp.float32)
    sq = jnp.sum(x * x, axis=-1, keepdims=True)
    inv = jnp.minimum(lax.rsqrt(sq), jnp.float32(1e12))
    out_ref[...] = (x * inv).astype(out_ref.dtype)


def _nt_xent_tile_kernel(k_ref, q_ref, p_ref, out_ref, *, inv_t, tq):
    i = pl.program_id(0)

    q = q_ref[...]            # (tq, D)   normalized queries (this view)
    p = p_ref[...]            # (tq, D)   normalized partner-view rows
    k = k_ref[...]            # (2N, D)   resident normalized keys (both views)

    # One MXU pass per tile: (tq, 2N) logits, contracting on D (no transpose copy).
    scores = lax.dot_general(
        q, k, (((1,), (1,)), ((), ())),
        preferred_element_type=jnp.float32,
    ) * jnp.float32(inv_t)

    # Mask the self-similarity column (global row index == column index).
    # Equivalent to the reference's `sim - diag(1e9)`: exp underflows to exactly 0.
    rows = i * tq + lax.broadcasted_iota(jnp.int32, scores.shape, 0)
    cols = lax.broadcasted_iota(jnp.int32, scores.shape, 1)
    scores = jnp.where(rows == cols, jnp.float32(-1e9), scores)

    # Row-wise logsumexp (exactly one exp per logit — EUP is the binding unit).
    m = jnp.max(scores, axis=-1, keepdims=True)                       # (tq, 1)
    lse = m + jnp.log(jnp.sum(jnp.exp(scores - m), axis=-1, keepdims=True))

    # Positive logit = diag(sim_ij) = inv_t * <q_r, partner_r>  (row-wise VPU reduce).
    pos = jnp.sum(q.astype(jnp.float32) * p.astype(jnp.float32),
                  axis=-1, keepdims=True) * jnp.float32(inv_t)        # (tq, 1)

    out_ref[...] = lse - pos                                          # per-row loss


def nt_xent(z_i, z_j, temperature=1.0, block_q=256):
    """Pallas TPU implementation of NT_Xent.forward. z_i, z_j: (N, D)."""
    n, d = z_i.shape
    assert z_j.shape == (n, d)

    # Stack the two views once: Z = [z_i ; z_j]  (2N, D).
    z = jnp.concatenate([z_i, z_j], axis=0)

    # Lane-dense feature dim: zero-pad D to a multiple of 128 (no effect on math).
    d_pad = ((d + 127) // 128) * 128
    if d_pad != d:
        z = jnp.pad(z, ((0, 0), (0, d_pad - d)))

    two_n = 2 * n

    # Query-row tile: multiple of 8 (f32 sublanes), divides N so partner tiles align.
    tq = min(block_q, n)
    tq -= tq % 8
    while tq > 0 and n % tq != 0:
        tq -= 8
    if tq <= 0:
        raise ValueError("NT_Xent Pallas kernel requires N to be a multiple of 8")
    num_tiles = two_n // tq
    half = n // tq

    # 1) Row-wise L2 normalization (tiled, parallel).
    zn = pl.pallas_call(
        _l2_normalize_kernel,
        out_shape=jax.ShapeDtypeStruct((two_n, d_pad), z.dtype),
        grid=(num_tiles,),
        in_specs=[pl.BlockSpec((tq, d_pad), lambda i: (i, 0))],
        out_specs=pl.BlockSpec((tq, d_pad), lambda i: (i, 0)),
        compiler_params=pltpu.CompilerParams(dimension_semantics=("parallel",)),
    )(z)

    # 2) Fused similarity + log-softmax + positive extraction, tiled over query rows.
    kernel = functools.partial(
        _nt_xent_tile_kernel, inv_t=float(1.0 / temperature), tq=tq)
    row_losses = pl.pallas_call(
        kernel,
        out_shape=jax.ShapeDtypeStruct((two_n, 1), jnp.float32),
        grid=(num_tiles,),
        in_specs=[
            # full normalized Z resident as the key matrix (constant block index)
            pl.BlockSpec((two_n, d_pad), lambda i: (0, 0)),
            # query-row tile of this grid step
            pl.BlockSpec((tq, d_pad), lambda i: (i, 0)),
            # partner-view tile: rows (global_row + N) mod 2N
            pl.BlockSpec((tq, d_pad), lambda i: ((i + half) % num_tiles, 0)),
        ],
        out_specs=pl.BlockSpec((tq, 1), lambda i: (i, 0)),
        compiler_params=pltpu.CompilerParams(dimension_semantics=("parallel",)),
    )(zn, zn, zn)

    # loss = (loss_i + loss_j) / (2N)  — trivial 2N-element reduction outside.
    return jnp.sum(row_losses) / jnp.float32(two_n)


if __name__ == "__main__":
    key = jax.random.PRNGKey(0)
    k1, k2 = jax.random.split(key)
    N, D = 8, 32
    z_i = jax.random.normal(k1, (N, D), dtype=jnp.float32)
    z_j = jax.random.normal(k2, (N, D), dtype=jnp.float32)

    loss = nt_xent(z_i, z_j, temperature=0.5)
    jax.block_until_ready(loss)
    print("KERNEL_OK")
</pallas_src>

<mosaic_0001>
module attributes {stable_mosaic.version = 11 : i64} {
  func.func @_l2_normalize_kernel(%arg0: i32, %arg1: memref<8x128xf32, #tpu.memory_space<vmem>>, %arg2: memref<8x128xf32, #tpu.memory_space<vmem>>) attributes {dimension_semantics = [#tpu.dimension_semantics<parallel>], iteration_bounds = array<i64: 2>, scalar_prefetch = 0 : i64, scratch_operands = 0 : i64, tpu.core_type = #tpu.core_type<tc>, window_params = [{transform_indices = @transform_0, window_bounds = array<i64: 8, 128>}, {transform_indices = @transform_1, window_bounds = array<i64: 8, 128>}]} {
    %c0 = arith.constant 0 : index
    %c0_0 = arith.constant 0 : index
    %0 = vector.load %arg1[%c0, %c0_0] : memref<8x128xf32, #tpu.memory_space<vmem>>, vector<8x128xf32>
    %1 = arith.mulf %0, %0 : vector<8x128xf32>
    %cst = arith.constant dense<0.000000e+00> : vector<8xf32>
    %2 = vector.multi_reduction <add>, %1, %cst [1] : vector<8x128xf32> to vector<8xf32>
    %3 = vector.shape_cast %2 : vector<8xf32> to vector<8x1xf32>
    %4 = math.rsqrt %3 : vector<8x1xf32>
    %cst_1 = arith.constant 9.99999995E+11 : f32
    %5 = vector.broadcast %cst_1 : f32 to vector<8x1xf32>
    %6 = arith.minimumf %4, %5 : vector<8x1xf32>
    %7 = vector.broadcast %6 : vector<8x1xf32> to vector<8x128xf32>
    %8 = arith.mulf %0, %7 : vector<8x128xf32>
    %c0_2 = arith.constant 0 : index
    %c0_3 = arith.constant 0 : index
    %9 = vector.load %arg2[%c0_2, %c0_3] : memref<8x128xf32, #tpu.memory_space<vmem>>, vector<8x128xf32>
    tpu.vector_store %arg2[%c0_2, %c0_3], %8 {strides = array<i32>} : memref<8x128xf32, #tpu.memory_space<vmem>>, vector<8x128xf32>,
    return
  }
  func.func @transform_0(%arg0: i32) -> (i32, i32) {
    %c0_i32 = arith.constant 0 : i32
    %c0_i32_0 = arith.constant 0 : i32
    return %arg0, %c0_i32 : i32, i32
  }
  func.func @transform_1(%arg0: i32) -> (i32, i32) {
    %c0_i32 = arith.constant 0 : i32
    %c0_i32_0 = arith.constant 0 : i32
    return %arg0, %c0_i32 : i32, i32
  }
}

</mosaic_0001>

<llo_original>
// kernel: tpu_custom_call.1
$region0: #{tpu_custom_call.1}
  #allocation0 [shape = 'u32[]', space=smem, size = 0x4, offset = 0x4, fixed_abs, tag = 'smem constant byte address 0x4 - core index']
  #allocation1 [shape = 'u32[72,128]{1,0:T(1,128)}', space=vmem, size = 0x9000, scoped, tag = 'internal scratch']
  %s0 = inlined_call_operand.hbm [shape: f32[16,128], index: 0, kind: input, shape index: {}]
  %s1 = inlined_call_operand.hbm [shape: f32[16,128], index: 1, kind: output, shape index: {}]
  %s2 = sld [smem:[#allocation0]]
  $region41: #{tpu_custom_call.1} parent=0
    _
  %s4 = ssub.s32 1, %s2
  %s5 = scalar_select 0, %s4, %s2
  $region1: #{tpu_custom_call.1} parent=0
    #allocation2 [shape = 'u8[8192]{0}', space=vmem, size = 0x2000, scoped, tag = 'input window, operand 0']
    #allocation3 [shape = 's32[2]{0}', space=sflag, size = 0x8, scoped, tag = 'scoped memory for tpu_custom_call.1']
    #allocation4 [shape = 's32[2]{0}', space=sflag, size = 0x8, scoped, tag = 'scoped memory for tpu_custom_call.1']
    #allocation5 [shape = 'u8[8192]{0}', space=vmem, size = 0x2000, scoped, tag = 'output window, operand 0']
    %6 = vsyncpa [#allocation3], 0
    %s7 = scalar_lea.sflag [#allocation3], 1
    %8 = vsyncpa %s7, 0
    %9 = vsyncpa [#allocation4], 0
    %s10 = scalar_lea.sflag [#allocation4], 1
    %11 = vsyncpa %s10, 0
    loop: start=0, step=1, limit=4
    $region2: #{tpu_custom_call.1} parent=1 // loop_pre_header
      _
    $region3: #{tpu_custom_call.1} parent=1 // loop_header
      %s13 = sphi 0, %s17
      %p14 = scmp.ge.s32.totalorder %s13, 4
      %s23 = sphi 0, %s25
      %s26 = sphi 0, %s23
      %s27 = sphi 0, %s26
      %s43 = sphi 0, %s27
      %s49 = sphi 0, %s51
      %s52 = sphi 0, %s49
      %s53 = sphi 0, %s52
      %s69 = sphi 0, %s53
    $region4: #{tpu_custom_call.1} parent=1 // loop_header_branch
      %16 = sbr.rel (%p14) target = $region8
    $region5: #{tpu_custom_call.1} parent=1 // loop_body
      %s18 = ssub.s32 %s13, 1
      %s19 = ssub.s32 %s13, 2
      %s20 = sadd.s32 %s13, 1
      %s21 = ssub.s32 %s13, %s20
      %p22 = scmp.eq.s32.totalorder %s21, 0
      %s24 = sadd.s32 %s23, 1
      %s25 = scalar_select %p22, %s23, %s24
      %p28 = pneg %p22
      %p29 = scmp.eq.s32.totalorder %s13, 1
      %p30 = por %p28, %p29
      %p31 = scmp.ne.s32.totalorder %s23, %s26
      %p32 = scmp.eq.s32.totalorder %s13, 0
      %p33 = por %p31, %p32
      %p34 = scmp.ne.s32.totalorder %s23, %s26
      %p35 = scmp.eq.s32.totalorder %s18, 1
      %p36 = por %p34, %p35
      %p37 = scmp.ne.s32.totalorder %s26, %s27
      %p38 = scmp.eq.s32.totalorder %s18, 0
      %p39 = por %p37, %p38
      %p40 = scmp.ne.s32.totalorder %s26, %s27
      %p41 = scmp.eq.s32.totalorder %s19, 1
      %p42 = por %p40, %p41
      %p44 = scmp.ne.s32.totalorder %s27, %s43
      %p45 = scmp.eq.s32.totalorder %s19, 0
      %p46 = por %p44, %p45
      %s47 = ssub.s32 %s13, %s20
      %p48 = scmp.eq.s32.totalorder %s47, 0
      %s50 = sadd.s32 %s49, 1
      %s51 = scalar_select %p48, %s49, %s50
      %p54 = pneg %p48
      %p55 = scmp.eq.s32.totalorder %s13, 1
      %p56 = por %p54, %p55
      %p57 = scmp.ne.s32.totalorder %s49, %s52
      %p58 = scmp.eq.s32.totalorder %s13, 0
      %p59 = por %p57, %p58
      %p60 = scmp.ne.s32.totalorder %s49, %s52
      %p61 = scmp.eq.s32.totalorder %s18, 1
      %p62 = por %p60, %p61
      %p63 = scmp.ne.s32.totalorder %s52, %s53
      %p64 = scmp.eq.s32.totalorder %s18, 0
      %p65 = por %p63, %p64
      %p66 = scmp.ne.s32.totalorder %s52, %s53
      %p67 = scmp.eq.s32.totalorder %s19, 1
      %p68 = por %p66, %p67
      %p70 = scmp.ne.s32.totalorder %s53, %s69
      %p71 = scmp.eq.s32.totalorder %s19, 0
      %p72 = por %p70, %p71
      %p73 = scmp.le.s32.totalorder 1, %s13
      %p74 = scmp.lt.s32.totalorder %s13, 3
      %p75 = pnand %p73, %p74
      %p76 = pneg %p75
      // Predicated region
      $region9: #{tpu_custom_call.1} parent=5 // pred_check
        _
      $region10: #{tpu_custom_call.1} parent=5 // pred_check_branch
        %78 = sbr.rel (%p75) target = $region12
      $region11: #{tpu_custom_call.1} parent=5 // pred_region
        %s79 = ssub.s32 %s13, 1
      $region12: #{tpu_custom_call.1} parent=5 // pred_fallthru
        _
      %p80 = scmp.lt.s32.totalorder %s13, 2
      // Predicated region
      $region13: #{tpu_custom_call.1} parent=5 // pred_check
        %p81 = pneg %p80
      $region14: #{tpu_custom_call.1} parent=5 // pred_check_branch
        %83 = sbr.rel (%p81) target = $region16
      $region15: #{tpu_custom_call.1} parent=5 // pred_region
        // Predicated region
        $region17: #{tpu_custom_call.1} parent=15 // pred_check
          %p84 = pneg %p33
        $region18: #{tpu_custom_call.1} parent=15 // pred_check_branch
          %86 = sbr.rel (%p84) target = $region20
        $region19: #{tpu_custom_call.1} parent=15 // pred_region
          %s87 = sand.u32 %s23, 1
          %s88 = scalar_lea.sflag [#allocation3], %s87
          %s89 = sand.u32 %s23, 1
          %s90 = smul.addr %s89, 8
          %s91 = scalar_lea.vmem [#allocation2], %s90
          %93 = vsyncadd %s88, 0
          %s94 = smul.addr %s13, 8
          %s95 = scalar_lea.hbm %s0, %s94
          %s97 = sshll.u32 %s95, 4
          %s98 = int_to_ptr.hbm [resolvable:$true] %s97
          %s99 = sshll.u32 %s91, 4
          %s100 = int_to_ptr.vmem [resolvable:$true] %s99
          %102 = dma.hbm_to_vmem [thread:$0]  %s98, 128, %s100, %s88
        $region20: #{tpu_custom_call.1} parent=15 // pred_fallthru
          _
      $region16: #{tpu_custom_call.1} parent=5 // pred_fallthru
        _
      %p103 = scmp.le.s32.totalorder 1, %s13
      %p104 = scmp.lt.s32.totalorder %s13, 3
      %p105 = pnand %p103, %p104
      %p106 = pneg %p105
      // Predicated region
      $region21: #{tpu_custom_call.1} parent=5 // pred_check
        _
      $region22: #{tpu_custom_call.1} parent=5 // pred_check_branch
        %108 = sbr.rel (%p105) target = $region24
      $region23: #{tpu_custom_call.1} parent=5 // pred_region
        %s109 = ssub.s32 %s13, 1
        %s110 = sand.u32 %s26, 1
        %s111 = scalar_lea.sflag [#allocation3], %s110
        %s112 = sand.u32 %s26, 1
        %s113 = smul.addr %s112, 8
        %s114 = scalar_lea.vmem [#allocation2], %s113
        // Predicated region
        $region25: #{tpu_custom_call.1} parent=23 // pred_check
          %p115 = pneg %p39
        $region26: #{tpu_custom_call.1} parent=23 // pred_check_branch
          %117 = sbr.rel (%p115) target = $region28
        $region27: #{tpu_custom_call.1} parent=23 // pred_region
          %119 = dma.done %s111, 128
        $region28: #{tpu_custom_call.1} parent=23 // pred_fallthru
          _
        %s120 = sand.u32 %s26, 1
        %s121 = scalar_lea.sflag [#allocation3], %s120
        %s122 = sand.u32 %s26, 1
        %s123 = smul.addr %s122, 8
        %s124 = scalar_lea.vmem [#allocation2], %s123
        %p125 = pneg %p39
        %p126 = pneg %p36
        %p127 = pneg %p65
        %p128 = pneg %p62
        %s129 = sand.u32 %s52, 1
        %s130 = scalar_lea.sflag [#allocation4], %s129
        %s131 = sand.u32 %s52, 1
        %s132 = smul.addr %s131, 8
        %s133 = scalar_lea.vmem [#allocation5], %s132
        %v134 = vld [vmem:[%s114] sm:$0xff]
        %v135 = vmul.f32 %v134, %v134
        %136 = vadd.xlane.f32.xlu0 %v135
        %v137 = vpop.xlane.xlu0 %136
        %v138 = vrsqrt.pop %v137
        %v139 = vmul.f32 %v138, %v137
        %v140 = vmul.f32 %v139, %v138
        %v141 = vmul.f32 0.5, %v140
        %v142 = vsub.f32 1.5, %v141
        %v143 = vmul.f32 %v138, %v142
        %vm144 = vweird.f32 %v137
        %vm145 = vweird.f32 %v138
        %vm146 = vmor %vm144, %vm145
        %v147 = vsel %vm146, %v138, %v143
        %v148 = vmin.f32 %v147, 1e+12
        %v149 = vmul.f32 %v134, %v148
        %150 = vst [vmem:[%s133] sm:$0xff] %v149
        %s151 = sand.u32 %s52, 1
        %s152 = scalar_lea.sflag [#allocation4], %s151
        %s153 = sand.u32 %s52, 1
        %s154 = smul.addr %s153, 8
        %s155 = scalar_lea.vmem [#allocation5], %s154
        // Predicated region
        $region29: #{tpu_custom_call.1} parent=23 // pred_check
          %p156 = pneg %p62
        $region30: #{tpu_custom_call.1} parent=23 // pred_check_branch
          %158 = sbr.rel (%p156) target = $region32
        $region31: #{tpu_custom_call.1} parent=23 // pred_region
          %160 = vsyncadd %s152, 0
          %s161 = smul.addr %s18, 8
          %s162 = scalar_lea.hbm %s1, %s161
          %s164 = sshll.u32 %s155, 4
          %s165 = int_to_ptr.vmem [resolvable:$true] %s164
          %s166 = sshll.u32 %s162, 4
          %s167 = int_to_ptr.hbm [resolvable:$true] %s166
          %169 = dma.vmem_to_hbm [thread:$0]  %s165, 128, %s167, %s152
        $region32: #{tpu_custom_call.1} parent=23 // pred_fallthru
          _
      $region24: #{tpu_custom_call.1} parent=5 // pred_fallthru
        _
      %p170 = scmp.le.s32.totalorder 2, %s13
      // Predicated region
      $region33: #{tpu_custom_call.1} parent=5 // pred_check
        %p171 = pneg %p170
      $region34: #{tpu_custom_call.1} parent=5 // pred_check_branch
        %173 = sbr.rel (%p171) target = $region36
      $region35: #{tpu_custom_call.1} parent=5 // pred_region
        %s174 = ssub.s32 %s13, 2
        // Predicated region
        $region37: #{tpu_custom_call.1} parent=35 // pred_check
          %p175 = pneg %p68
        $region38: #{tpu_custom_call.1} parent=35 // pred_check_branch
          %177 = sbr.rel (%p175) target = $region40
        $region39: #{tpu_custom_call.1} parent=35 // pred_region
          %s178 = sand.u32 %s53, 1
          %s179 = scalar_lea.sflag [#allocation4], %s178
          %s180 = sand.u32 %s53, 1
          %s181 = smul.addr %s180, 8
          %s182 = scalar_lea.vmem [#allocation5], %s181
          %184 = dma.done %s179, 128
        $region40: #{tpu_custom_call.1} parent=35 // pred_fallthru
          _
      $region36: #{tpu_custom_call.1} parent=5 // pred_fallthru
        _
    $region6: #{tpu_custom_call.1} parent=1 // loop_footer
      %s17 = sadd.s32 1, %s13
    $region7: #{tpu_custom_call.1} parent=1 // loop_footer_branch
      %12 = sbr.rel target = $region3
    $region8: #{tpu_custom_call.1} parent=1 // loop_exit
      _
    %185 = vsyncpa [#allocation3], 1
    %s186 = scalar_lea.sflag [#allocation3], 1
    %187 = vsyncpa %s186, 1
    %188 = vsyncpa [#allocation4], 1
    %s189 = scalar_lea.sflag [#allocation4], 1
    %190 = vsyncpa %s189, 1

</llo_original>
